<compile_context>
chip_gen: v7x
topology: tpu7x:2x2x1
jax: 0.10.0
libtpu: 0.0.40
codegen_flags: <defaults>
</compile_context>

<pallas_src>
import functools

import jax
import jax.numpy as jnp
from jax import lax
from jax.experimental import pallas as pl
from jax.experimental.pallas import tpu as pltpu


def _se_kernel(x_ref, w1_ref, b1_ref, w2_ref, b2_ref, o_ref, *, inv_hw, use_mxu):
    # x_ref: (Nb, C, HW)   w1: (R, C)  b1: (1, R)  w2: (C, R)  b2: (1, C)

    # AdaptiveAvgPool2d(1): f32-accumulated sum over the spatial (lane) axis.
    pooled = jnp.sum(x_ref[...], axis=-1, dtype=jnp.float32) * inv_hw        # (Nb, C)

    if use_mxu:
        # 1x1 conv C -> R on the MXU (free slot in this HBM-bound kernel).
        h = lax.dot_general(pooled, w1_ref[...],
                            dimension_numbers=(((1,), (1,)), ((), ())),
                            preferred_element_type=jnp.float32)              # (Nb, R)
    else:
        # Tiny C*R: VPU broadcast-mul + lane reduce, intermediate is tiny.
        h = jnp.sum(pooled[:, None, :] * w1_ref[...][None, :, :], axis=-1)   # (Nb, R)
    h = h + b1_ref[...]
    h = h * jax.nn.sigmoid(h)                                                # SiLU

    if use_mxu:
        s = lax.dot_general(h, w2_ref[...],
                            dimension_numbers=(((1,), (1,)), ((), ())),
                            preferred_element_type=jnp.float32)              # (Nb, C)
    else:
        s = jnp.sum(h[:, None, :] * w2_ref[...][None, :, :], axis=-1)        # (Nb, C)
    s = jax.nn.sigmoid(s + b2_ref[...])                                      # (Nb, C)

    # Streaming scale: multiply in f32, cast exactly once on store.
    o_ref[...] = (x_ref[...].astype(jnp.float32) * s[:, :, None]).astype(o_ref.dtype)


def _vmem_capacity_bytes():
    """Physical per-core VMEM; conservative v7x fallback if query fails."""
    try:
        cap = getattr(pltpu.get_tpu_info(), "vmem_capacity_bytes", None)
        if cap:
            return int(cap)
    except Exception:
        pass
    return 64 << 20


def squeeze_excite(x, w1, b1, w2, b2):
    """x: (N, C, H, W); w1: (R, C), b1: (R,), w2: (C, R), b2: (C,)."""
    N, C, H, W = x.shape
    R = w1.shape[0]
    HW = H * W
    itemsize = jnp.dtype(x.dtype).itemsize

    # Free (view-level) reshape; no pad / slice passes over HBM.
    x_flat = x.reshape(N, C, HW)

    # --- images per grid step (nb) ------------------------------------------
    # Few-MiB blocks already reach ~85% of the HBM roofline; keep >=4 grid
    # steps when N allows it (v7x megacore / pipeline steady state).  No
    # divisor requirement: grid = cdiv(N, nb), last partial block is masked.
    per_image_bytes = C * HW * itemsize
    target_tile_bytes = 4 << 20
    nb = max(1, min(N, target_tile_bytes // per_image_bytes))
    min_steps = 4 if N >= 4 else max(N, 1)
    nb = min(nb, max(1, N // min_steps))
    grid_n = pl.cdiv(N, nb)

    # --- VMEM limit (generation-aware) --------------------------------------
    vmem_cap = _vmem_capacity_bytes()
    tile_bytes = nb * per_image_bytes
    weight_bytes = (R * C + C * R + R + C) * 4            # f32 weights + biases
    needed = 4 * tile_bytes + 4 * weight_bytes + (2 << 20)  # 2x(in+out) + headroom
    soft_cap = max(int(vmem_cap * 0.6), 8 << 20)           # ~38 MiB v7x, ~77 MiB v5e/v6e
    vmem_limit = int(min(max(needed, 8 << 20), soft_cap))

    # MXU for the two 1x1 convs unless C*R is trivially small.
    use_mxu = (C * R) >= 4096

    # Hoist casts out of the kernel: everything small arrives as f32.
    w1_f = w1.astype(jnp.float32)
    w2_f = w2.astype(jnp.float32)
    b1_2d = b1.reshape(1, R).astype(jnp.float32)
    b2_2d = b2.reshape(1, C).astype(jnp.float32)

    # Advisory cost estimate: HBM-bandwidth bound (~2 passes over x).
    cost = pl.CostEstimate(
        flops=2 * N * C * HW + 4 * N * C * R,
        transcendentals=N * (R + C),
        bytes_accessed=2 * N * C * HW * itemsize + weight_bytes,
    )

    out_flat = pl.pallas_call(
        functools.partial(_se_kernel, inv_hw=1.0 / HW, use_mxu=use_mxu),
        out_shape=jax.ShapeDtypeStruct((N, C, HW), x.dtype),
        grid_spec=pltpu.PrefetchScalarGridSpec(
            num_scalar_prefetch=0,
            grid=(grid_n,),
            in_specs=[
                pl.BlockSpec((nb, C, HW), lambda n: (n, 0, 0)),
                pl.BlockSpec((R, C), lambda n: (0, 0)),
                pl.BlockSpec((1, R), lambda n: (0, 0)),
                pl.BlockSpec((C, R), lambda n: (0, 0)),
                pl.BlockSpec((1, C), lambda n: (0, 0)),
            ],
            out_specs=pl.BlockSpec((nb, C, HW), lambda n: (n, 0, 0)),
        ),
        compiler_params=pltpu.CompilerParams(
            dimension_semantics=("parallel",),
            vmem_limit_bytes=vmem_limit,
        ),
        cost_estimate=cost,
    )(x_flat, w1_f, b1_2d, w2_f, b2_2d)

    return out_flat.reshape(N, C, H, W)


def _reference(x, w1, b1, w2, b2):
    pooled = jnp.mean(x, axis=(2, 3))                      # (N, C)
    h = pooled @ w1.T + b1                                 # (N, R)
    h = h * jax.nn.sigmoid(h)
    s = jax.nn.sigmoid(h @ w2.T + b2)                      # (N, C)
    return x * s[:, :, None, None]


def _run_case(key, N, C, R, H, W):
    kx, k1, k2, k3, k4 = jax.random.split(key, 5)
    x = jax.random.normal(kx, (N, C, H, W), dtype=jnp.float32)
    # Conv2d(out_chs, r_chs, 1): weight (R, C, 1, 1) -> (R, C); bias (R,)
    w1 = jax.random.normal(k1, (R, C), dtype=jnp.float32) * 0.1
    b1 = jax.random.normal(k2, (R,), dtype=jnp.float32) * 0.1
    # Conv2d(r_chs, out_chs, 1): weight (C, R, 1, 1) -> (C, R); bias (C,)
    w2 = jax.random.normal(k3, (C, R), dtype=jnp.float32) * 0.1
    b2 = jax.random.normal(k4, (C,), dtype=jnp.float32) * 0.1

    out = jax.block_until_ready(squeeze_excite(x, w1, b1, w2, b2))
    ref = _reference(x, w1, b1, w2, b2)
    assert out.shape == x.shape
    assert jnp.allclose(out, ref, atol=1e-4, rtol=1e-4), \
        f"mismatch vs reference for shape {(N, C, H, W)}"


if __name__ == "__main__":
    key = jax.random.PRNGKey(0)
    k_small, k_big = jax.random.split(key, 2)

    # Primary small case (VPU matvec path; HW multiple of 128).
    _run_case(k_small, N=2, C=4, R=2, H=16, W=16)
    # Secondary case: MXU path (C*R >= 4096), HW not a multiple of 128
    # (masked partial-lane stores), N not a multiple of the step count.
    _run_case(k_big, N=5, C=128, R=32, H=7, W=7)

    print("KERNEL_OK")
</pallas_src>

<mosaic_0001>
module attributes {stable_mosaic.version = 11 : i64} {
  func.func @_se_kernel(%arg0: i32, %arg1: memref<1x4x256xf32, #tpu.memory_space<vmem>>, %arg2: memref<2x4xf32, #tpu.memory_space<vmem>>, %arg3: memref<1x2xf32, #tpu.memory_space<vmem>>, %arg4: memref<4x2xf32, #tpu.memory_space<vmem>>, %arg5: memref<1x4xf32, #tpu.memory_space<vmem>>, %arg6: memref<1x4x256xf32, #tpu.memory_space<vmem>>) attributes {dimension_semantics = [#tpu.dimension_semantics<parallel>], iteration_bounds = array<i64: 2>, scalar_prefetch = 0 : i64, scratch_operands = 0 : i64, tpu.core_type = #tpu.core_type<tc>, window_params = [{transform_indices = @transform_0, window_bounds = array<i64: 1, 4, 256>}, {pipeline_mode = #tpu.pipeline_mode<synchronous>, transform_indices = @transform_1, window_bounds = array<i64: 2, 4>}, {pipeline_mode = #tpu.pipeline_mode<synchronous>, transform_indices = @transform_2, window_bounds = array<i64: 1, 2>}, {pipeline_mode = #tpu.pipeline_mode<synchronous>, transform_indices = @transform_3, window_bounds = array<i64: 4, 2>}, {pipeline_mode = #tpu.pipeline_mode<synchronous>, transform_indices = @transform_4, window_bounds = array<i64: 1, 4>}, {transform_indices = @transform_5, window_bounds = array<i64: 1, 4, 256>}]} {
    %c0 = arith.constant 0 : index
    %c0_0 = arith.constant 0 : index
    %c0_1 = arith.constant 0 : index
    %0 = vector.load %arg1[%c0, %c0_0, %c0_1] : memref<1x4x256xf32, #tpu.memory_space<vmem>>, vector<1x4x256xf32>
    %cst = arith.constant dense<0.000000e+00> : vector<1x4xf32>
    %1 = vector.multi_reduction <add>, %0, %cst [2] : vector<1x4x256xf32> to vector<1x4xf32>
    %cst_2 = arith.constant 3.906250e-03 : f32
    %2 = vector.broadcast %cst_2 : f32 to vector<1x4xf32>
    %3 = arith.mulf %1, %2 : vector<1x4xf32>
    %4 = vector.shape_cast %3 : vector<1x4xf32> to vector<1x1x4xf32>
    %c0_3 = arith.constant 0 : index
    %c0_4 = arith.constant 0 : index
    %5 = vector.load %arg2[%c0_3, %c0_4] : memref<2x4xf32, #tpu.memory_space<vmem>>, vector<2x4xf32>
    %6 = vector.shape_cast %5 : vector<2x4xf32> to vector<1x2x4xf32>
    %7 = vector.broadcast %4 : vector<1x1x4xf32> to vector<1x2x4xf32>
    %8 = arith.mulf %7, %6 : vector<1x2x4xf32>
    %cst_5 = arith.constant dense<0.000000e+00> : vector<1x2xf32>
    %9 = vector.multi_reduction <add>, %8, %cst_5 [2] : vector<1x2x4xf32> to vector<1x2xf32>
    %c0_6 = arith.constant 0 : index
    %c0_7 = arith.constant 0 : index
    %10 = vector.load %arg3[%c0_6, %c0_7] : memref<1x2xf32, #tpu.memory_space<vmem>>, vector<1x2xf32>
    %11 = arith.addf %9, %10 : vector<1x2xf32>
    %12 = arith.negf %11 : vector<1x2xf32>
    %13 = math.exp %12 : vector<1x2xf32>
    %cst_8 = arith.constant 1.000000e+00 : f32
    %14 = vector.broadcast %cst_8 : f32 to vector<1x2xf32>
    %15 = arith.addf %14, %13 : vector<1x2xf32>
    %16 = arith.divf %14, %15 : vector<1x2xf32>
    %17 = arith.mulf %11, %16 : vector<1x2xf32>
    %18 = vector.shape_cast %17 : vector<1x2xf32> to vector<1x1x2xf32>
    %c0_9 = arith.constant 0 : index
    %c0_10 = arith.constant 0 : index
    %19 = vector.load %arg4[%c0_9, %c0_10] : memref<4x2xf32, #tpu.memory_space<vmem>>, vector<4x2xf32>
    %20 = vector.shape_cast %19 : vector<4x2xf32> to vector<1x4x2xf32>
    %21 = vector.broadcast %18 : vector<1x1x2xf32> to vector<1x4x2xf32>
    %22 = arith.mulf %21, %20 : vector<1x4x2xf32>
    %cst_11 = arith.constant dense<0.000000e+00> : vector<1x4xf32>
    %23 = vector.multi_reduction <add>, %22, %cst_11 [2] : vector<1x4x2xf32> to vector<1x4xf32>
    %c0_12 = arith.constant 0 : index
    %c0_13 = arith.constant 0 : index
    %24 = vector.load %arg5[%c0_12, %c0_13] : memref<1x4xf32, #tpu.memory_space<vmem>>, vector<1x4xf32>
    %25 = arith.addf %23, %24 : vector<1x4xf32>
    %26 = arith.negf %25 : vector<1x4xf32>
    %27 = math.exp %26 : vector<1x4xf32>
    %cst_14 = arith.constant 1.000000e+00 : f32
    %28 = vector.broadcast %cst_14 : f32 to vector<1x4xf32>
    %29 = arith.addf %28, %27 : vector<1x4xf32>
    %30 = arith.divf %28, %29 : vector<1x4xf32>
    %c0_15 = arith.constant 0 : index
    %c0_16 = arith.constant 0 : index
    %c0_17 = arith.constant 0 : index
    %31 = vector.load %arg1[%c0_15, %c0_16, %c0_17] : memref<1x4x256xf32, #tpu.memory_space<vmem>>, vector<1x4x256xf32>
    %32 = vector.shape_cast %30 : vector<1x4xf32> to vector<1x4x1xf32>
    %33 = vector.broadcast %32 : vector<1x4x1xf32> to vector<1x4x256xf32>
    %34 = arith.mulf %31, %33 : vector<1x4x256xf32>
    %c0_18 = arith.constant 0 : index
    %c0_19 = arith.constant 0 : index
    %c0_20 = arith.constant 0 : index
    %35 = vector.load %arg6[%c0_18, %c0_19, %c0_20] : memref<1x4x256xf32, #tpu.memory_space<vmem>>, vector<1x4x256xf32>
    tpu.vector_store %arg6[%c0_18, %c0_19, %c0_20], %34 {strides = array<i32>} : memref<1x4x256xf32, #tpu.memory_space<vmem>>, vector<1x4x256xf32>,
    return
  }
  func.func @transform_0(%arg0: i32) -> (i32, i32, i32) {
    %c0_i32 = arith.constant 0 : i32
    %c0_i32_0 = arith.constant 0 : i32
    %c0_i32_1 = arith.constant 0 : i32
    return %arg0, %c0_i32, %c0_i32_0 : i32, i32, i32
  }
  func.func @transform_1(%arg0: i32) -> (i32, i32) {
    %c0_i32 = arith.constant 0 : i32
    %c0_i32_0 = arith.constant 0 : i32
    %c0_i32_1 = arith.constant 0 : i32
    return %c0_i32, %c0_i32_0 : i32, i32
  }
  func.func @transform_2(%arg0: i32) -> (i32, i32) {
    %c0_i32 = arith.constant 0 : i32
    %c0_i32_0 = arith.constant 0 : i32
    %c0_i32_1 = arith.constant 0 : i32
    return %c0_i32, %c0_i32_0 : i32, i32
  }
  func.func @transform_3(%arg0: i32) -> (i32, i32) {
    %c0_i32 = arith.constant 0 : i32
    %c0_i32_0 = arith.constant 0 : i32
    %c0_i32_1 = arith.constant 0 : i32
    return %c0_i32, %c0_i32_0 : i32, i32
  }
  func.func @transform_4(%arg0: i32) -> (i32, i32) {
    %c0_i32 = arith.constant 0 : i32
    %c0_i32_0 = arith.constant 0 : i32
    %c0_i32_1 = arith.constant 0 : i32
    return %c0_i32, %c0_i32_0 : i32, i32
  }
  func.func @transform_5(%arg0: i32) -> (i32, i32, i32) {
    %c0_i32 = arith.constant 0 : i32
    %c0_i32_0 = arith.constant 0 : i32
    %c0_i32_1 = arith.constant 0 : i32
    return %arg0, %c0_i32, %c0_i32_0 : i32, i32, i32
  }
}

</mosaic_0001>

<llo_original>
// kernel: tpu_custom_call.1
$region0: #{tpu_custom_call.1}
  #allocation0 [shape = 'u32[]', space=smem, size = 0x4, offset = 0x4, fixed_abs, tag = 'smem constant byte address 0x4 - core index']
  #allocation1 [shape = 'u32[144,128]{1,0:T(1,128)}', space=vmem, size = 0x12000, scoped, tag = 'internal scratch']
  %s0 = inlined_call_operand.hbm [shape: f32[2,4,256], index: 0, kind: input, shape index: {}]
  %s1 = inlined_call_operand.vmem [shape: f32[2,4], index: 1, kind: input, shape index: {}]
  %s2 = inlined_call_operand.vmem [shape: f32[1,2], index: 2, kind: input, shape index: {}]
  %s3 = inlined_call_operand.vmem [shape: f32[4,2], index: 3, kind: input, shape index: {}]
  %s4 = inlined_call_operand.vmem [shape: f32[1,4], index: 4, kind: input, shape index: {}]
  %s5 = inlined_call_operand.hbm [shape: f32[2,4,256], index: 5, kind: output, shape index: {}]
  %s6 = sld [smem:[#allocation0]]
  $region57: #{tpu_custom_call.1} parent=0
    _
  %s8 = ssub.s32 1, %s6
  %s9 = scalar_select 0, %s8, %s6
  $region1: #{tpu_custom_call.1} parent=0
    #allocation2 [shape = 'u8[8192]{0}', space=vmem, size = 0x2000, scoped, tag = 'input window, operand 0']
    #allocation3 [shape = 's32[2]{0}', space=sflag, size = 0x8, scoped, tag = 'scoped memory for tpu_custom_call.1']
    #allocation4 [shape = 's32[2]{0}', space=sflag, size = 0x8, scoped, tag = 'scoped memory for tpu_custom_call.1']
    #allocation5 [shape = 'u8[8192]{0}', space=vmem, size = 0x2000, scoped, tag = 'output window, operand 0']
    %10 = vsyncpa [#allocation3], 0
    %s11 = scalar_lea.sflag [#allocation3], 1
    %12 = vsyncpa %s11, 0
    %13 = vsyncpa [#allocation4], 0
    %s14 = scalar_lea.sflag [#allocation4], 1
    %15 = vsyncpa %s14, 0
    loop: start=0, step=1, limit=4
    $region2: #{tpu_custom_call.1} parent=1 // loop_pre_header
      _
    $region3: #{tpu_custom_call.1} parent=1 // loop_header
      %s17 = sphi 0, %s21
      %p18 = scmp.ge.s32.totalorder %s17, 4
      %s27 = sphi 0, %s29
      %s30 = sphi 0, %s27
      %s31 = sphi 0, %s30
      %s47 = sphi 0, %s31
      %s51 = sphi 0, %s51
      %s53 = sphi 0, %s51
      %s54 = sphi 0, %s53
      %s68 = sphi 0, %s54
      %s72 = sphi 0, %s72
      %s74 = sphi 0, %s72
      %s75 = sphi 0, %s74
      %s89 = sphi 0, %s75
      %s93 = sphi 0, %s93
      %s95 = sphi 0, %s93
      %s96 = sphi 0, %s95
      %s110 = sphi 0, %s96
      %s114 = sphi 0, %s114
      %s116 = sphi 0, %s114
      %s117 = sphi 0, %s116
      %s131 = sphi 0, %s117
      %s137 = sphi 0, %s139
      %s140 = sphi 0, %s137
      %s141 = sphi 0, %s140
      %s157 = sphi 0, %s141
    $region4: #{tpu_custom_call.1} parent=1 // loop_header_branch
      %20 = sbr.rel (%p18) target = $region8
    $region5: #{tpu_custom_call.1} parent=1 // loop_body
      %s22 = ssub.s32 %s17, 1
      %s23 = ssub.s32 %s17, 2
      %s24 = sadd.s32 %s17, 1
      %s25 = ssub.s32 %s17, %s24
      %p26 = scmp.eq.s32.totalorder %s25, 0
      %s28 = sadd.s32 %s27, 1
      %s29 = scalar_select %p26, %s27, %s28
      %p32 = pneg %p26
      %p33 = scmp.eq.s32.totalorder %s17, 1
      %p34 = por %p32, %p33
      %p35 = scmp.ne.s32.totalorder %s27, %s30
      %p36 = scmp.eq.s32.totalorder %s17, 0
      %p37 = por %p35, %p36
      %p38 = scmp.ne.s32.totalorder %s27, %s30
      %p39 = scmp.eq.s32.totalorder %s22, 1
      %p40 = por %p38, %p39
      %p41 = scmp.ne.s32.totalorder %s30, %s31
      %p42 = scmp.eq.s32.totalorder %s22, 0
      %p43 = por %p41, %p42
      %p44 = scmp.ne.s32.totalorder %s30, %s31
      %p45 = scmp.eq.s32.totalorder %s23, 1
      %p46 = por %p44, %p45
      %p48 = scmp.ne.s32.totalorder %s31, %s47
      %p49 = scmp.eq.s32.totalorder %s23, 0
      %p50 = por %p48, %p49
      %s52 = sadd.s32 %s51, 1
      %p55 = scmp.eq.s32.totalorder %s17, 1
      %p56 = scmp.ne.s32.totalorder %s51, %s53
      %p57 = scmp.eq.s32.totalorder %s17, 0
      %p58 = por %p56, %p57
      %p59 = scmp.ne.s32.totalorder %s51, %s53
      %p60 = scmp.eq.s32.totalorder %s22, 1
      %p61 = por %p59, %p60
      %p62 = scmp.ne.s32.totalorder %s53, %s54
      %p63 = scmp.eq.s32.totalorder %s22, 0
      %p64 = por %p62, %p63
      %p65 = scmp.ne.s32.totalorder %s53, %s54
      %p66 = scmp.eq.s32.totalorder %s23, 1
      %p67 = por %p65, %p66
      %p69 = scmp.ne.s32.totalorder %s54, %s68
      %p70 = scmp.eq.s32.totalorder %s23, 0
      %p71 = por %p69, %p70
      %s73 = sadd.s32 %s72, 1
      %p76 = scmp.eq.s32.totalorder %s17, 1
      %p77 = scmp.ne.s32.totalorder %s72, %s74
      %p78 = scmp.eq.s32.totalorder %s17, 0
      %p79 = por %p77, %p78
      %p80 = scmp.ne.s32.totalorder %s72, %s74
      %p81 = scmp.eq.s32.totalorder %s22, 1
      %p82 = por %p80, %p81
      %p83 = scmp.ne.s32.totalorder %s74, %s75
      %p84 = scmp.eq.s32.totalorder %s22, 0
      %p85 = por %p83, %p84
      %p86 = scmp.ne.s32.totalorder %s74, %s75
      %p87 = scmp.eq.s32.totalorder %s23, 1
      %p88 = por %p86, %p87
      %p90 = scmp.ne.s32.totalorder %s75, %s89
      %p91 = scmp.eq.s32.totalorder %s23, 0
      %p92 = por %p90, %p91
      %s94 = sadd.s32 %s93, 1
      %p97 = scmp.eq.s32.totalorder %s17, 1
      %p98 = scmp.ne.s32.totalorder %s93, %s95
      %p99 = scmp.eq.s32.totalorder %s17, 0
      %p100 = por %p98, %p99
      %p101 = scmp.ne.s32.totalorder %s93, %s95
      %p102 = scmp.eq.s32.totalorder %s22, 1
      %p103 = por %p101, %p102
      %p104 = scmp.ne.s32.totalorder %s95, %s96
      %p105 = scmp.eq.s32.totalorder %s22, 0
      %p106 = por %p104, %p105
      %p107 = scmp.ne.s32.totalorder %s95, %s96
      %p108 = scmp.eq.s32.totalorder %s23, 1
      %p109 = por %p107, %p108
      %p111 = scmp.ne.s32.totalorder %s96, %s110
      %p112 = scmp.eq.s32.totalorder %s23, 0
      %p113 = por %p111, %p112
      %s115 = sadd.s32 %s114, 1
      %p118 = scmp.eq.s32.totalorder %s17, 1
      %p119 = scmp.ne.s32.totalorder %s114, %s116
      %p120 = scmp.eq.s32.totalorder %s17, 0
      %p121 = por %p119, %p120
      %p122 = scmp.ne.s32.totalorder %s114, %s116
      %p123 = scmp.eq.s32.totalorder %s22, 1
      %p124 = por %p122, %p123
      %p125 = scmp.ne.s32.totalorder %s116, %s117
      %p126 = scmp.eq.s32.totalorder %s22, 0
      %p127 = por %p125, %p126
      %p128 = scmp.ne.s32.totalorder %s116, %s117
      %p129 = scmp.eq.s32.totalorder %s23, 1
      %p130 = por %p128, %p129
      %p132 = scmp.ne.s32.totalorder %s117, %s131
      %p133 = scmp.eq.s32.totalorder %s23, 0
      %p134 = por %p132, %p133
      %s135 = ssub.s32 %s17, %s24
      %p136 = scmp.eq.s32.totalorder %s135, 0
      %s138 = sadd.s32 %s137, 1
      %s139 = scalar_select %p136, %s137, %s138
      %p142 = pneg %p136
      %p143 = scmp.eq.s32.totalorder %s17, 1
      %p144 = por %p142, %p143
      %p145 = scmp.ne.s32.totalorder %s137, %s140
      %p146 = scmp.eq.s32.totalorder %s17, 0
      %p147 = por %p145, %p146
      %p148 = scmp.ne.s32.totalorder %s137, %s140
      %p149 = scmp.eq.s32.totalorder %s22, 1
      %p150 = por %p148, %p149
      %p151 = scmp.ne.s32.totalorder %s140, %s141
      %p152 = scmp.eq.s32.totalorder %s22, 0
      %p153 = por %p151, %p152
      %p154 = scmp.ne.s32.totalorder %s140, %s141
      %p155 = scmp.eq.s32.totalorder %s23, 1
      %p156 = por %p154, %p155
      %p158 = scmp.ne.s32.totalorder %s141, %s157
      %p159 = scmp.eq.s32.totalorder %s23, 0
      %p160 = por %p158, %p159
      %p161 = scmp.le.s32.totalorder 1, %s17
      %p162 = scmp.lt.s32.totalorder %s17, 3
      %p163 = pnand %p161, %p162
      %p164 = pneg %p163
      // Predicated region
      $region9: #{tpu_custom_call.1} parent=5 // pred_check
        _
      $region10: #{tpu_custom_call.1} parent=5 // pred_check_branch
        %166 = sbr.rel (%p163) target = $region12
      $region11: #{tpu_custom_call.1} parent=5 // pred_region
        %s167 = ssub.s32 %s17, 1
        // Predicated region
        $region13: #{tpu_custom_call.1} parent=11 // pred_check
          %p168 = pneg %p64
        $region14: #{tpu_custom_call.1} parent=11 // pred_check_branch
          %170 = sbr.rel (%p168) target = $region16
        $region15: #{tpu_custom_call.1} parent=11 // pred_region
          _
        $region16: #{tpu_custom_call.1} parent=11 // pred_fallthru
          _
        // Predicated region
        $region17: #{tpu_custom_call.1} parent=11 // pred_check
          %p171 = pneg %p85
        $region18: #{tpu_custom_call.1} parent=11 // pred_check_branch
          %173 = sbr.rel (%p171) target = $region20
        $region19: #{tpu_custom_call.1} parent=11 // pred_region
          _
        $region20: #{tpu_custom_call.1} parent=11 // pred_fallthru
          _
        // Predicated region
        $region21: #{tpu_custom_call.1} parent=11 // pred_check
          %p174 = pneg %p106
        $region22: #{tpu_custom_call.1} parent=11 // pred_check_branch
          %176 = sbr.rel (%p174) target = $region24
        $region23: #{tpu_custom_call.1} parent=11 // pred_region
          _
        $region24: #{tpu_custom_call.1} parent=11 // pred_fallthru
          _
        // Predicated region
        $region25: #{tpu_custom_call.1} parent=11 // pred_check
          %p177 = pneg %p127
        $region26: #{tpu_custom_call.1} parent=11 // pred_check_branch
          %179 = sbr.rel (%p177) target = $region28
        $region27: #{tpu_custom_call.1} parent=11 // pred_region
          _
        $region28: #{tpu_custom_call.1} parent=11 // pred_fallthru
          _
      $region12: #{tpu_custom_call.1} parent=5 // pred_fallthru
        _
      %p180 = scmp.lt.s32.totalorder %s17, 2
      // Predicated region
      $region29: #{tpu_custom_call.1} parent=5 // pred_check
        %p181 = pneg %p180
      $region30: #{tpu_custom_call.1} parent=5 // pred_check_branch
        %183 = sbr.rel (%p181) target = $region32
      $region31: #{tpu_custom_call.1} parent=5 // pred_region
        // Predicated region
        $region33: #{tpu_custom_call.1} parent=31 // pred_check
          %p184 = pneg %p37
        $region34: #{tpu_custom_call.1} parent=31 // pred_check_branch
          %186 = sbr.rel (%p184) target = $region36
        $region35: #{tpu_custom_call.1} parent=31 // pred_region
          %s187 = sand.u32 %s27, 1
          %s188 = scalar_lea.sflag [#allocation3], %s187
          %s189 = sand.u32 %s27, 1
          %s190 = smul.addr %s189, 8
          %s191 = scalar_lea.vmem [#allocation2], %s190
          %s193 = ssub.s32 128, 128
          %194 = vsyncadd %s188, %s193
          %s195 = smul.addr %s17, 2
          %s196 = smul.addr %s195, 64
          %s197 = scalar_lea.hbm %s0, %s196
          %s199 = sshll.u32 %s191, 4
          %s200 = int_to_ptr.vmem [resolvable:$true] %s199
          %202 = dma.hbm_to_vmem [thread:$0]  %s197, 128, %s200, %s188
        $region36: #{tpu_custom_call.1} parent=31 // pred_fallthru
          _
      $region32: #{tpu_custom_call.1} parent=5 // pred_fallthru
        _
      %p203 = scmp.le.s32.totalorder 1, %s17
      %p204 = scmp.lt.s32.totalorder %s17, 3
      %p205 = pnand %p203, %p204
      %p206 = pneg %p205
      // Predicated region
      $region37: #{tpu_custom_call.1} parent=5 // pred_check
        _
      $region38: #{tpu_custom_call.1} parent=5 // pred_check_branch
        %208 = sbr.rel (%p205) target = $region40
      $region39: #{tpu_custom_call.1} parent=5 // pred_region
        %s209 = ssub.s32 %s17, 1
        %s210 = sand.u32 %s30, 1
        %s211 = scalar_lea.sflag [#allocation3], %s210
        %s212 = sand.u32 %s30, 1
        %s213 = smul.addr %s212, 8
        %s214 = scalar_lea.vmem [#allocation2], %s213
        // Predicated region
        $region41: #{tpu_custom_call.1} parent=39 // pred_check
          %p215 = pneg %p43
        $region42: #{tpu_custom_call.1} parent=39 // pred_check_branch
          %217 = sbr.rel (%p215) target = $region44
        $region43: #{tpu_custom_call.1} parent=39 // pred_region
          %218 = dma.done %s211, 128
        $region44: #{tpu_custom_call.1} parent=39 // pred_fallthru
          _
        %s219 = sand.u32 %s30, 1
        %s220 = scalar_lea.sflag [#allocation3], %s219
        %s221 = sand.u32 %s30, 1
        %s222 = smul.addr %s221, 8
        %s223 = scalar_lea.vmem [#allocation2], %s222
        %p224 = pneg %p43
        %p225 = pneg %p40
        %p226 = pneg %p64
        %p227 = pneg %p61
        %p228 = pneg %p85
        %p229 = pneg %p82
        %p230 = pneg %p106
        %p231 = pneg %p103
        %p232 = pneg %p127
        %p233 = pneg %p124
        %p234 = pneg %p153
        %p235 = pneg %p150
        %s236 = sand.u32 %s140, 1
        %s237 = scalar_lea.sflag [#allocation4], %s236
        %s238 = sand.u32 %s140, 1
        %s239 = smul.addr %s238, 8
        %s240 = scalar_lea.vmem [#allocation5], %s239
        %v241 = vld [vmem:[%s214] sm:$0xff]
        %v243 = vcombine.high %v241, %v241
        %vm245 = vcmask 1043456
        %v246 = vsel %vm245, %v241, 0.0
        %v247 = vsel %vm245, %v243, 0.0
        %v248 = vadd.f32 %v246, %v247
        %249 = vadd.xlane.f32.xlu0 %v248
        %v250 = vpop.xlane.xlu0 %249
        %v251 = vmul.f32 %v250, 0.00390625
        %v252 = vld [vmem:[%s1] sm:$0x3]
        %v254 = vlaneseq
        %v255 = vshrl.u32 %v254, 7
        %v256 = vsub.s32 0, %v255
        %v257 = vrot.slane %v252, %v256
        %259 = vbcast.lane.b32.xlu0 %v257, 256
        %v260 = vpop.permute.xlu0 %259
        %v261 = vlaneseq
        %v262 = vshrl.u32 %v261, 7
        %v263 = vsub.s32 1, %v262
        %v264 = vrot.slane %v252, %v263
        %266 = vbcast.lane.b32.xlu0 %v264, 256
        %v267 = vpop.permute.xlu0 %266
        %v270 = vmul.f32 %v251, %v260
        %v271 = vmul.f32 %v251, %v267
        %274 = vset.pattern.permute.xlu0 0
        %275 = vperm.xlu0 %274, %v270
        %v276 = vpop.permute.xlu0 %275
        %277 = vset.pattern.permute.xlu0 0
        %278 = vperm.xlu0 %277, %v271
        %v279 = vpop.permute.xlu0 %278
        %v280 = vlaneseq
        %v281 = vand.u32 %v280, 127
        %v282 = vlaneseq
        %v283 = vshrl.u32 %v282, 7
        %v284 = vsub.s32 %v281, %v283
        %v285 = vrot.slane %v276, %v284
        %v286 = vlaneseq
        %v287 = vshrl.u32 %v286, 7
        %v288 = vsub.s32 %v281, %v287
        %v289 = vrot.slane %v279, %v288
        %vm290 = vcmask 1041409
        %v291 = vsel %vm290, %v289, %v285
        %vm293 = vcmask 25600
        %v294 = vsel %vm293, %v291, 0.0
        %295 = vadd.xlane.f32.xlu0 %v294
        %v296 = vpop.xlane.xlu0 %295
        %v297 = vld [vmem:[%s2] sm:$0x1]
        %v299 = vlaneseq
        %v300 = vshrl.u32 %v299, 7
        %v301 = vsub.s32 0, %v300
        %v302 = vrot.slane %v297, %v301
        %304 = vbcast.lane.b32.xlu0 %v302, 256
        %v305 = vpop.permute.xlu0 %304
        %v307 = vadd.f32 %v296, %v305
        %v308 = vxor.u32 %v307, 2147483648
        %v309 = vmul.f32 %v308, 1.442695
        %v310 = vpow.pop %v309
        %v311 = vadd.f32 %v310, 1.0
        %v312 = vrcp.pop %v311
        %v313 = vmul.f32 1.0, %v312
        %v314 = vmul.f32 %v307, %v313
        %v315 = vld [vmem:[%s3] sm:$0xf]
        %v317 = vlaneseq
        %v318 = vshrl.u32 %v317, 7
        %v319 = vsub.s32 0, %v318
        %v320 = vrot.slane %v315, %v319
        %322 = vbcast.lane.b32.xlu0 %v320, 256
        %v323 = vpop.permute.xlu0 %322
        %v324 = vlaneseq
        %v325 = vshrl.u32 %v324, 7
        %v326 = vsub.s32 1, %v325
        %v327 = vrot.slane %v315, %v326
        %329 = vbcast.lane.b32.xlu0 %v327, 256
        %v330 = vpop.permute.xlu0 %329
        %v331 = vlaneseq
        %v332 = vshrl.u32 %v331, 7
        %v333 = vsub.s32 2, %v332
        %v334 = vrot.slane %v315, %v333
        %336 = vbcast.lane.b32.xlu0 %v334, 256
        %v337 = vpop.permute.xlu0 %336
        %v338 = vlaneseq
        %v339 = vshrl.u32 %v338, 7
        %v340 = vsub.s32 3, %v339
        %v341 = vrot.slane %v315, %v340
        %343 = vbcast.lane.b32.xlu0 %v341, 256
        %v344 = vpop.permute.xlu0 %343
        %v349 = vmul.f32 %v314, %v323
        %v350 = vmul.f32 %v314, %v330
        %v351 = vmul.f32 %v314, %v337
        %v352 = vmul.f32 %v314, %v344
        %357 = vset.pattern.permute.xlu0 0
        %358 = vperm.xlu0 %357, %v349
        %v359 = vpop.permute.xlu0 %358
        %360 = vset.pattern.permute.xlu0 0
        %361 = vperm.xlu0 %360, %v350
        %v362 = vpop.permute.xlu0 %361
        %363 = vset.pattern.permute.xlu0 0
        %364 = vperm.xlu0 %363, %v351
        %v365 = vpop.permute.xlu0 %364
        %366 = vset.pattern.permute.xlu0 0
        %367 = vperm.xlu0 %366, %v352
        %v368 = vpop.permute.xlu0 %367
        %v369 = vlaneseq
        %v370 = vshrl.u32 %v369, 7
        %v371 = vsub.s32 %v281, %v370
        %v372 = vrot.slane %v359, %v371
        %v373 = vlaneseq
        %v374 = vshrl.u32 %v373, 7
        %v375 = vsub.s32 %v281, %v374
        %v376 = vrot.slane %v362, %v375
        %v377 = vlaneseq
        %v378 = vshrl.u32 %v377, 7
        %v379 = vsub.s32 %v281, %v378
        %v380 = vrot.slane %v365, %v379
        %v381 = vlaneseq
        %v382 = vshrl.u32 %v381, 7
        %v383 = vsub.s32 %v281, %v382
        %v384 = vrot.slane %v368, %v383
        %v385 = vsel %vm290, %v376, %v372
        %vm386 = vcmask 1042434
        %v387 = vsel %vm386, %v380, %v385
        %vm388 = vcmask 1043459
        %v389 = vsel %vm388, %v384, %v387
        %vm391 = vcmask 11264
        %v392 = vsel %vm391, %v389, 0.0
        %393 = vadd.xlane.f32.xlu0 %v392
        %v394 = vpop.xlane.xlu0 %393
        %v395 = vld [vmem:[%s4] sm:$0x1]
        %v397 = vlaneseq
        %v398 = vshrl.u32 %v397, 7
        %v399 = vsub.s32 0, %v398
        %v400 = vrot.slane %v395, %v399
        %402 = vbcast.lane.b32.xlu0 %v400, 256
        %v403 = vpop.permute.xlu0 %402
        %v405 = vadd.f32 %v394, %v403
        %v406 = vxor.u32 %v405, 2147483648
        %v407 = vmul.f32 %v406, 1.442695
        %v408 = vpow.pop %v407
        %v409 = vadd.f32 %v408, 1.0
        %v410 = vrcp.pop %v409
        %v411 = vmul.f32 1.0, %v410
        %413 = vset.pattern.permute.xlu0 0
        %414 = vperm.xlu0 %413, %v411
        %v415 = vpop.permute.xlu0 %414
        %v417 = vunpack.c.l.s4 839922192
        %v418 = vunpack.c.0.s8 %v417
        %v419 = vlaneseq
        %v420 = vshrl.u32 %v419, 7
        %v421 = vsub.s32 %v418, %v420
        %v422 = vrot.slane %v415, %v421
        %v424 = vmul.f32 %v241, %v422
        %425 = vst [vmem:[%s240] sm:$0xff] %v424
        %s426 = sand.u32 %s140, 1
        %s427 = scalar_lea.sflag [#allocation4], %s426
        %s428 = sand.u32 %s140, 1
        %s429 = smul.addr %s428, 8
        %s430 = scalar_lea.vmem [#allocation5], %s429
        // Predicated region
        $region45: #{tpu_custom_call.1} parent=39 // pred_check
          %p431 = pneg %p150
        $region46: #{tpu_custom_call.1} parent=39 // pred_check_branch
          %433 = sbr.rel (%p431) target = $region48
        $region47: #{tpu_custom_call.1} parent=39 // pred_region
          %s435 = ssub.s32 128, 128
          %436 = vsyncadd %s427, %s435
          %s437 = smul.addr %s22, 2
          %s438 = smul.addr %s437, 64
          %s439 = scalar_lea.hbm %s5, %s438
          %s441 = sshll.u32 %s430, 4
          %s442 = int_to_ptr.vmem [resolvable:$true] %s441
          %444 = dma.vmem_to_hbm [thread:$0]  %s442, 128, %s439, %s427
        $region48: #{tpu_custom_call.1} parent=39 // pred_fallthru
          _
      $region40: #{tpu_custom_call.1} parent=5 // pred_fallthru
        _
      %p445 = scmp.le.s32.totalorder 2, %s17
      // Predicated region
      $region49: #{tpu_custom_call.1} parent=5 // pred_check
        %p446 = pneg %p445
      $region50: #{tpu_custom_call.1} parent=5 // pred_check_branch
        %448 = sbr.rel (%p446) target = $region52
      $region51: #{tpu_custom_call.1} parent=5 // pred_region
        %s449 = ssub.s32 %s17, 2
        // Predicated region
        $region53: #{tpu_custom_call.1} parent=51 // pred_check
          %p450 = pneg %p156
        $region54: #{tpu_custom_call.1} parent=51 // pred_check_branch
          %452 = sbr.rel (%p450) target = $region56
        $region55: #{tpu_custom_call.1} parent=51 // pred_region
          %s453 = sand.u32 %s141, 1
          %s454 = scalar_lea.sflag [#allocation4], %s453
          %s455 = sand.u32 %s141, 1
          %s456 = smul.addr %s455, 8
          %s457 = scalar_lea.vmem [#allocation5], %s456
          %458 = dma.done %s454, 128
        $region56: #{tpu_custom_call.1} parent=51 // pred_fallthru
          _
      $region52: #{tpu_custom_call.1} parent=5 // pred_fallthru
        _
    $region6: #{tpu_custom_call.1} parent=1 // loop_footer
      %s21 = sadd.s32 1, %s17
    $region7: #{tpu_custom_call.1} parent=1 // loop_footer_branch
      %16 = sbr.rel target = $region3
    $region8: #{tpu_custom_call.1} parent=1 // loop_exit
      _
    %459 = vsyncpa [#allocation3], 1
    %s460 = scalar_lea.sflag [#allocation3], 1
    %461 = vsyncpa %s460, 1
    %462 = vsyncpa [#allocation4], 1
    %s463 = scalar_lea.sflag [#allocation4], 1
    %464 = vsyncpa %s463, 1

</llo_original>
